<compile_context>
chip_gen: v5e
topology: v5e:2x2
jax: 0.10.0
libtpu: 0.0.40
codegen_flags: <defaults>
</compile_context>

<pallas_src>
import functools

import jax
import jax.numpy as jnp
from jax import lax
from jax.experimental import pallas as pl
from jax.experimental.pallas import tpu as pltpu


def _round_up(x, m):
    return ((x + m - 1) // m) * m


def _int_pow(x, n):
    """x**n for Python int n >= 1 via exponentiation-by-squaring (VPU only)."""
    result = None
    base = x
    while n > 0:
        if n & 1:
            result = base if result is None else result * base
        n >>= 1
        if n:
            base = base * base
    return result


def _gemp_kernel(x_ref, o_ref, acc_ref, *, p, eps, inv_n, true_s, ts, need_mask):
    # x_ref: (TR, TS) VMEM tile of the (R, S) input
    # o_ref: (TR, 1)  VMEM tile of the (R, 1) output
    # acc_ref: (TR, 128) f32 scratch accumulator, persistent across the S axis
    k = pl.program_id(1)
    nk = pl.num_programs(1)

    @pl.when(k == 0)
    def _init():
        acc_ref[...] = jnp.zeros_like(acc_ref)

    x = x_ref[...].astype(jnp.float32)          # (TR, TS)

    # x ** p : integer p stays on the 4 VALU slots; general p uses pow (EUP).
    if float(p) == float(int(p)) and int(p) >= 1:
        xp = _int_pow(x, int(p))
    else:
        xp = jnp.power(x, p)

    if need_mask:
        # Zero out lanes beyond the true spatial extent (partial last chunk /
        # garbage in the padded part of an edge block).
        col = lax.broadcasted_iota(jnp.int32, x.shape, 1) + k * ts
        xp = jnp.where(col < true_s, xp, 0.0)

    # Stage 1: fold lane groups into the (TR, 128) accumulator with VPU adds
    # (no per-chunk cross-lane XLU reduce).
    ng = ts // 128
    partial = xp[:, 0:128]
    for g in range(1, ng):
        partial = partial + xp[:, g * 128:(g + 1) * 128]
    acc_ref[...] += partial

    @pl.when(k == nk - 1)
    def _finalize():
        # Stage 2: single cross-lane reduce per row tile, then mean + eps and
        # the 1/p root (only TR transcendentals -> negligible EUP work).
        total = jnp.sum(acc_ref[...], axis=-1, keepdims=True)   # (TR, 1)
        out = jnp.power(total * inv_n + eps, 1.0 / p)
        o_ref[...] = out.astype(o_ref.dtype)


def gemp(x, p=3.0, eps=1e-12):
    """Generalized-mean pooling matching GeMP.forward.

    x: (B, C, H, W) / (B, C, S) -> (B, C);  x: (B, S) -> (B,)
    """
    if x.ndim == 2:
        x2 = x
        out_shape_final = (x.shape[0],)
    else:
        b, c = x.shape[:2]
        x2 = x.reshape(b * c, -1)
        out_shape_final = (b, c)

    R, S = x2.shape

    # Tile sizes: rows multiple of 8, lanes multiple of 128; <= 2 MiB (f32)
    # per input buffer so the double-buffered pipeline fits default scoped
    # VMEM on v5e / v6e / v7x.
    TR = min(256, _round_up(R, 8))
    TS = min(2048, _round_up(S, 128))

    grid = (pl.cdiv(R, TR), pl.cdiv(S, TS))
    need_mask = (S % TS) != 0

    kernel = functools.partial(
        _gemp_kernel,
        p=float(p),
        eps=float(eps),
        inv_n=1.0 / float(S),
        true_s=S,
        ts=TS,
        need_mask=need_mask,
    )

    out = pl.pallas_call(
        kernel,
        out_shape=jax.ShapeDtypeStruct((R, 1), x2.dtype),
        grid_spec=pltpu.PrefetchScalarGridSpec(
            num_scalar_prefetch=0,
            grid=grid,
            in_specs=[pl.BlockSpec((TR, TS), lambda i, k: (i, k))],
            out_specs=pl.BlockSpec((TR, 1), lambda i, k: (i, 0)),
            scratch_shapes=[pltpu.VMEM((TR, 128), jnp.float32)],
        ),
        compiler_params=pltpu.CompilerParams(
            dimension_semantics=("parallel", "arbitrary")),
    )(x2)

    return out[:, 0].reshape(out_shape_final)


def gemp_reference(x, p=3.0, eps=1e-12):
    """Pure-JAX reference mirroring the PyTorch forward."""
    if x.ndim != 2:
        b, c = x.shape[:2]
        x = x.reshape(b, c, -1)
    return (jnp.mean(x ** p, axis=-1) + eps) ** (1.0 / p)


if __name__ == "__main__":
    key = jax.random.PRNGKey(0)
    B, C, H, W = 2, 4, 16, 16
    # GeM pooling is applied to non-negative feature maps (post-ReLU).
    x = jax.random.uniform(key, (B, C, H, W), dtype=jnp.float32)

    out = gemp(x, p=3.0, eps=1e-12)
    jax.block_until_ready(out)
    ref = gemp_reference(x, p=3.0, eps=1e-12)
    assert out.shape == (B, C), out.shape
    assert jnp.allclose(out, ref, atol=1e-5, rtol=1e-5), (out, ref)

    # Second check: non-integer p (general pow path) + spatial size that is
    # not a multiple of 128 (exercises the in-kernel lane mask).
    x2 = jax.random.uniform(jax.random.PRNGKey(1), (2, 4, 7, 7),
                            dtype=jnp.float32)
    out2 = gemp(x2, p=2.5, eps=1e-12)
    jax.block_until_ready(out2)
    ref2 = gemp_reference(x2, p=2.5, eps=1e-12)
    assert out2.shape == (2, 4), out2.shape
    assert jnp.allclose(out2, ref2, atol=1e-5, rtol=1e-5), (out2, ref2)

    print("KERNEL_OK")
</pallas_src>

<mosaic_0001>
module attributes {stable_mosaic.version = 11 : i64} {
  func.func @_gemp_kernel(%arg0: i32, %arg1: i32, %arg2: memref<8x256xf32, #tpu.memory_space<vmem>>, %arg3: memref<8x1xf32, #tpu.memory_space<vmem>>, %arg4: memref<8x128xf32, #tpu.memory_space<vmem>>) attributes {dimension_semantics = [#tpu.dimension_semantics<parallel>, #tpu.dimension_semantics<arbitrary>], iteration_bounds = array<i64: 1, 1>, scalar_prefetch = 0 : i64, scratch_operands = 1 : i64, tpu.core_type = #tpu.core_type<tc>, window_params = [{transform_indices = @transform_0, window_bounds = array<i64: 8, 256>}, {transform_indices = @transform_1, window_bounds = array<i64: 8, 1>}]} {
    %c0_i32 = arith.constant 0 : i32
    %0 = arith.cmpi eq, %arg1, %c0_i32 : i32
    %1 = arith.extui %0 : i1 to i32
    %c0_i32_0 = arith.constant 0 : i32
    %2 = arith.cmpi ne, %1, %c0_i32_0 : i32
    scf.if %2 {
      %cst = arith.constant 0.000000e+00 : f32
      %15 = vector.broadcast %cst : f32 to vector<8x128xf32>
      %c0_8 = arith.constant 0 : index
      %c0_9 = arith.constant 0 : index
      %16 = vector.load %arg4[%c0_8, %c0_9] : memref<8x128xf32, #tpu.memory_space<vmem>>, vector<8x128xf32>
      tpu.vector_store %arg4[%c0_8, %c0_9], %15 {strides = array<i32>} : memref<8x128xf32, #tpu.memory_space<vmem>>, vector<8x128xf32>,
    } else {
    }
    %c0 = arith.constant 0 : index
    %c0_1 = arith.constant 0 : index
    %3 = vector.load %arg2[%c0, %c0_1] : memref<8x256xf32, #tpu.memory_space<vmem>>, vector<8x256xf32>
    %4 = arith.mulf %3, %3 : vector<8x256xf32>
    %5 = arith.mulf %3, %4 : vector<8x256xf32>
    %6 = vector.extract_strided_slice %5 {offsets = [0, 0], sizes = [8, 128], strides = [1, 1]} : vector<8x256xf32> to vector<8x128xf32>
    %7 = vector.extract_strided_slice %5 {offsets = [0, 128], sizes = [8, 128], strides = [1, 1]} : vector<8x256xf32> to vector<8x128xf32>
    %8 = arith.addf %6, %7 : vector<8x128xf32>
    %c0_2 = arith.constant 0 : index
    %c0_3 = arith.constant 0 : index
    %9 = vector.load %arg4[%c0_2, %c0_3] : memref<8x128xf32, #tpu.memory_space<vmem>>, vector<8x128xf32>
    %10 = arith.addf %9, %8 : vector<8x128xf32>
    %c0_4 = arith.constant 0 : index
    %c0_5 = arith.constant 0 : index
    %11 = vector.load %arg4[%c0_4, %c0_5] : memref<8x128xf32, #tpu.memory_space<vmem>>, vector<8x128xf32>
    tpu.vector_store %arg4[%c0_4, %c0_5], %10 {strides = array<i32>} : memref<8x128xf32, #tpu.memory_space<vmem>>, vector<8x128xf32>,
    %c0_i32_6 = arith.constant 0 : i32
    %12 = arith.cmpi eq, %arg1, %c0_i32_6 : i32
    %13 = arith.extui %12 : i1 to i32
    %c0_i32_7 = arith.constant 0 : i32
    %14 = arith.cmpi ne, %13, %c0_i32_7 : i32
    scf.if %14 {
      %c0_8 = arith.constant 0 : index
      %c0_9 = arith.constant 0 : index
      %15 = vector.load %arg4[%c0_8, %c0_9] : memref<8x128xf32, #tpu.memory_space<vmem>>, vector<8x128xf32>
      %cst = arith.constant dense<0.000000e+00> : vector<8xf32>
      %16 = vector.multi_reduction <add>, %15, %cst [1] : vector<8x128xf32> to vector<8xf32>
      %17 = vector.shape_cast %16 : vector<8xf32> to vector<8x1xf32>
      %cst_10 = arith.constant 3.906250e-03 : f32
      %18 = vector.broadcast %cst_10 : f32 to vector<8x1xf32>
      %19 = arith.mulf %17, %18 : vector<8x1xf32>
      %cst_11 = arith.constant 9.99999996E-13 : f32
      %20 = vector.broadcast %cst_11 : f32 to vector<8x1xf32>
      %21 = arith.addf %19, %20 : vector<8x1xf32>
      %cst_12 = arith.constant 0.333333343 : f32
      %22 = vector.broadcast %cst_12 : f32 to vector<8x1xf32>
      %23 = math.powf %21, %22 : vector<8x1xf32>
      %c0_13 = arith.constant 0 : index
      %c0_14 = arith.constant 0 : index
      %24 = vector.load %arg3[%c0_13, %c0_14] : memref<8x1xf32, #tpu.memory_space<vmem>>, vector<8x1xf32>
      tpu.vector_store %arg3[%c0_13, %c0_14], %23 {strides = array<i32>} : memref<8x1xf32, #tpu.memory_space<vmem>>, vector<8x1xf32>,
    } else {
    }
    return
  }
  func.func @transform_0(%arg0: i32, %arg1: i32) -> (i32, i32) {
    %c0_i32 = arith.constant 0 : i32
    return %arg0, %arg1 : i32, i32
  }
  func.func @transform_1(%arg0: i32, %arg1: i32) -> (i32, i32) {
    %c0_i32 = arith.constant 0 : i32
    %c0_i32_0 = arith.constant 0 : i32
    return %arg0, %c0_i32 : i32, i32
  }
}

</mosaic_0001>

<llo_original>
// kernel: tpu_custom_call.1
$region0: #{tpu_custom_call.1}
  #allocation0 [shape = 'u32[]', space=smem, size = 0x4, offset = 0x4, fixed_abs, tag = 'smem constant byte address 0x4 - core index']
  #allocation1 [shape = 'u32[72,128]{1,0:T(1,128)}', space=vmem, size = 0x9000, scoped, tag = 'internal scratch']
  #allocation2 [shape = 'f32[8,128]{1,0:T(8,128)}', space=vmem, size = 0x1000, scoped, tag = 'scratch operand']
  %s0 = inlined_call_operand.hbm [shape: f32[8,256], index: 0, kind: input, shape index: {}]
  %s1 = inlined_call_operand.vmem [shape: f32[8,1], index: 1, kind: output, shape index: {}]
  %s2 = sld [smem:[#allocation0]]
  $region26: #{tpu_custom_call.1} parent=0
    _
  %s4 = ssub.s32 1, %s2
  %s5 = scalar_select 0, %s4, %s2
  $region1: #{tpu_custom_call.1} parent=0
    #allocation3 [shape = 'u8[8192]{0}', space=vmem, size = 0x2000, scoped, tag = 'input window, operand 0, single buffered']
    #allocation4 [shape = 's32[1]{0}', space=sflag, size = 0x4, scoped, tag = 'scoped memory for tpu_custom_call.1']
    %6 = vsyncpa [#allocation4], 0
    // Predicated region
    $region2: #{tpu_custom_call.1} parent=1 // pred_check
      _
    $region3: #{tpu_custom_call.1} parent=1 // pred_check_branch
      %8 = sbr.rel (0) target = $region5
    $region4: #{tpu_custom_call.1} parent=1 // pred_region
      %10 = vsyncadd [#allocation4], 0
      %s12 = sshll.u32 %s0, 4
      %s13 = int_to_ptr.hbm [resolvable:$true] %s12
      %s14 = sshll.u32 [#allocation3], 4
      %s15 = int_to_ptr.vmem [resolvable:$true] %s14
      %17 = dma.hbm_to_vmem [thread:$0]  %s13, 256, %s15, [#allocation4]
    $region5: #{tpu_custom_call.1} parent=1 // pred_fallthru
      _
    // Predicated region
    $region6: #{tpu_custom_call.1} parent=1 // pred_check
      _
    $region7: #{tpu_custom_call.1} parent=1 // pred_check_branch
      %19 = sbr.rel (0) target = $region9
    $region8: #{tpu_custom_call.1} parent=1 // pred_region
      %21 = dma.done [#allocation4], 256
    $region9: #{tpu_custom_call.1} parent=1 // pred_fallthru
      _
    %p22 = scmp.eq.s32.totalorder 0, 0
    // Predicated region
    $region10: #{tpu_custom_call.1} parent=1 // pred_check
      %p23 = pneg %p22
    $region11: #{tpu_custom_call.1} parent=1 // pred_check_branch
      %25 = sbr.rel (%p23) target = $region13
    $region12: #{tpu_custom_call.1} parent=1 // pred_region
      %26 = vst [vmem:[#allocation2] sm:$0xff] 0.0
    $region13: #{tpu_custom_call.1} parent=1 // pred_fallthru
      _
    %v27 = vld [vmem:[#allocation3] sm:$0xff]
    %v28 = vld [vmem:[#allocation3 + $0x8] sm:$0xff]
    %v29 = vmul.f32 %v27, %v27
    %v30 = vmul.f32 %v28, %v28
    %v31 = vmul.f32 %v27, %v29
    %v32 = vmul.f32 %v28, %v30
    %v33 = vadd.f32 %v31, %v32
    %v34 = vld [vmem:[#allocation2] sm:$0xff]
    %v35 = vadd.f32 %v34, %v33
    %36 = vst [vmem:[#allocation2] sm:$0xff] %v35
    // Predicated region
    $region14: #{tpu_custom_call.1} parent=1 // pred_check
      %p37 = pneg %p22
    $region15: #{tpu_custom_call.1} parent=1 // pred_check_branch
      %39 = sbr.rel (%p37) target = $region17
    $region16: #{tpu_custom_call.1} parent=1 // pred_region
      %v40 = vld [vmem:[#allocation2] sm:$0xff]
      %41 = vadd.xlane.f32.xlu0 %v40
      %v42 = vpop.xlane.xlu0 %41
      %v43 = vmul.f32 %v42, 0.00390625
      %v44 = vadd.f32 %v43, 1e-12
      %v45 = vpow.f32 %v44, 0.33333334
      %vm46 = vcmask 7168
      %47 = vst.msk [vmem:[%s1] sm:$0xff] %vm46, %v45
    $region17: #{tpu_custom_call.1} parent=1 // pred_fallthru
      _
    // Predicated region
    $region18: #{tpu_custom_call.1} parent=1 // pred_check
      _
    $region19: #{tpu_custom_call.1} parent=1 // pred_check_branch
      %49 = sbr.rel (0) target = $region21
    $region20: #{tpu_custom_call.1} parent=1 // pred_region
      _
    $region21: #{tpu_custom_call.1} parent=1 // pred_fallthru
      _
    // Predicated region
    $region22: #{tpu_custom_call.1} parent=1 // pred_check
      _
    $region23: #{tpu_custom_call.1} parent=1 // pred_check_branch
      %51 = sbr.rel (0) target = $region25
    $region24: #{tpu_custom_call.1} parent=1 // pred_region
      _
    $region25: #{tpu_custom_call.1} parent=1 // pred_fallthru
      _
    %52 = vsyncpa [#allocation4], 1

</llo_original>
